<compile_context>
chip_gen: v7x
topology: tpu7x:2x2x1
jax: 0.10.0
libtpu: 0.0.40
codegen_flags: <defaults>
</compile_context>

<pallas_src>
import jax
import jax.numpy as jnp
from jax import lax
from jax.experimental import pallas as pl
from jax.experimental.pallas import tpu as pltpu

BN_EPS = 1e-5


def _projection_head_kernel(x_ref, w1_ref, gamma_ref, beta_ref, w2_ref, b2_ref,
                            o_ref, acc_ref):
    # grid = (n, h): n = output-feature tile (parallel), h = hidden tile (reduction, last)
    h_idx = pl.program_id(1)

    @pl.when(h_idx == 0)
    def _init():
        acc_ref[...] = jnp.zeros_like(acc_ref)

    # ---- Linear 1 for this hidden tile: [B, Din] @ [Din, TH] (bias dropped:
    #      it is exactly cancelled by the BN batch-mean subtraction) ----
    h = jnp.dot(x_ref[...], w1_ref[...], preferred_element_type=jnp.float32)

    # ---- BatchNorm1d (train-mode batch stats) fused into one scale/shift pass ----
    mean = jnp.mean(h, axis=0, keepdims=True)             # [1, TH]
    d = h - mean                                          # one [B, TH] VPU pass
    var = jnp.mean(d * d, axis=0, keepdims=True)          # [1, TH] (biased var)
    scale = gamma_ref[...] * lax.rsqrt(var + BN_EPS)      # [1, TH], rsqrt on EUP
    # (d * scale + beta) == h*scale + (beta - mean*scale): single FMA pass, then ReLU
    h = jnp.maximum(d * scale + beta_ref[...], 0.0)

    # ---- Linear 2 partial product over this hidden tile, accumulated in f32 ----
    acc_ref[...] += jnp.dot(h.astype(w2_ref.dtype), w2_ref[...],
                            preferred_element_type=jnp.float32)

    @pl.when(h_idx == pl.num_programs(1) - 1)
    def _finalize():
        o_ref[...] = (acc_ref[...] + b2_ref[...]).astype(o_ref.dtype)


def _pick_tile(dim, preferred):
    """Largest tile <= preferred that is a multiple of 128 and divides dim,
    else the full dim (TPU block last-dims must be %128==0 or == full dim)."""
    if dim <= preferred:
        return dim
    t = (preferred // 128) * 128
    while t >= 128:
        if dim % t == 0:
            return t
        t -= 128
    return dim


def projection_head_forward(x, params):
    """x: [B, in_dim] -> [B, out_dim] float32 (training-mode BN semantics)."""
    # Host-side degenerate-input branches from the PyTorch module (static shapes).
    if x.ndim != 2:
        return x
    B, in_dim = x.shape
    w1, gamma, beta, w2, b2 = (params["w1"], params["gamma"], params["beta"],
                               params["w2"], params["b2"])
    hidden = w1.shape[1]
    out_dim = w2.shape[1]
    if in_dim == 0:
        return jnp.zeros((B, out_dim), jnp.float32)

    th = _pick_tile(hidden, 512)    # hidden tile (K of Linear 2)
    tn = _pick_tile(out_dim, 256)   # output-feature tile (lane-dense, >=128-wide)
    grid = (out_dim // tn, hidden // th)    # reduction (hidden) axis last

    grid_spec = pltpu.PrefetchScalarGridSpec(
        num_scalar_prefetch=0,
        grid=grid,
        in_specs=[
            pl.BlockSpec((B, in_dim), lambda n, h: (0, 0)),    # x: full, resident
            pl.BlockSpec((in_dim, th), lambda n, h: (0, h)),   # w1 hidden tile
            pl.BlockSpec((1, th), lambda n, h: (0, h)),        # gamma
            pl.BlockSpec((1, th), lambda n, h: (0, h)),        # beta
            pl.BlockSpec((th, tn), lambda n, h: (h, n)),       # w2 tile
            pl.BlockSpec((1, tn), lambda n, h: (0, n)),        # b2
        ],
        out_specs=pl.BlockSpec((B, tn), lambda n, h: (0, n)),
        scratch_shapes=[pltpu.VMEM((B, tn), jnp.float32)],
    )

    return pl.pallas_call(
        _projection_head_kernel,
        out_shape=jax.ShapeDtypeStruct((B, out_dim), jnp.float32),
        grid_spec=grid_spec,
        compiler_params=pltpu.CompilerParams(
            dimension_semantics=("parallel", "arbitrary"),
            vmem_limit_bytes=32 << 20,   # right-sized; v7x physical VMEM is 64 MiB
        ),
    )(x, w1, gamma, beta, w2, b2)


def init_projection_head_params(key, in_dim, hidden_dim=None, out_dim=256,
                                dtype=jnp.float32):
    """Deterministic init mirroring PyTorch defaults (uniform +-1/sqrt(fan_in)).
    Weights stored pre-transposed as [in_features, out_features]; pass
    dtype=jnp.bfloat16 to halve weight HBM traffic (f32 accumulation kept)."""
    hidden = hidden_dim if (hidden_dim is not None and hidden_dim > 0) else in_dim
    k1, k2, k3, k4 = jax.random.split(key, 4)
    bound1 = 1.0 / jnp.sqrt(in_dim)
    bound2 = 1.0 / jnp.sqrt(hidden)
    return {
        "w1": jax.random.uniform(k1, (in_dim, hidden), jnp.float32,
                                 -bound1, bound1).astype(dtype),
        # b1 kept only for the reference / torch-parity; not used by the kernel.
        "b1": jax.random.uniform(k2, (1, hidden), jnp.float32, -bound1, bound1),
        "gamma": jnp.ones((1, hidden), jnp.float32),
        "beta": jnp.zeros((1, hidden), jnp.float32),
        "w2": jax.random.uniform(k3, (hidden, out_dim), jnp.float32,
                                 -bound2, bound2).astype(dtype),
        "b2": jax.random.uniform(k4, (1, out_dim), jnp.float32, -bound2, bound2),
    }


def _reference_forward(x, params):
    """Pure-JAX emulation of the PyTorch module (includes b1, unfused BN)."""
    h = x @ params["w1"].astype(jnp.float32) + params["b1"]
    mean = jnp.mean(h, axis=0, keepdims=True)
    var = jnp.mean((h - mean) ** 2, axis=0, keepdims=True)
    h = (h - mean) / jnp.sqrt(var + BN_EPS)
    h = h * params["gamma"] + params["beta"]
    h = jnp.maximum(h, 0.0)
    return h @ params["w2"].astype(jnp.float32) + params["b2"]


if __name__ == "__main__":
    # Small, module-consistent shapes: batch=8, in_dim=32, hidden=in_dim (default), out_dim=256.
    B, IN_DIM, OUT_DIM = 8, 32, 256
    key = jax.random.PRNGKey(0)
    kx, kp = jax.random.split(key)

    x = jax.random.normal(kx, (B, IN_DIM), dtype=jnp.float32)
    params = init_projection_head_params(kp, IN_DIM, hidden_dim=None, out_dim=OUT_DIM)

    out = projection_head_forward(x, params)
    out = jax.block_until_ready(out)

    ref = _reference_forward(x, params)
    assert out.shape == (B, OUT_DIM)
    assert jnp.allclose(out, ref, atol=1e-4, rtol=1e-4), "mismatch vs reference"

    print("KERNEL_OK")
</pallas_src>

<mosaic_0001>
module attributes {stable_mosaic.version = 11 : i64} {
  func.func @_projection_head_kernel(%arg0: i32, %arg1: i32, %arg2: memref<8x32xf32, #tpu.memory_space<vmem>>, %arg3: memref<32x32xf32, #tpu.memory_space<vmem>>, %arg4: memref<1x32xf32, #tpu.memory_space<vmem>>, %arg5: memref<1x32xf32, #tpu.memory_space<vmem>>, %arg6: memref<32x256xf32, #tpu.memory_space<vmem>>, %arg7: memref<1x256xf32, #tpu.memory_space<vmem>>, %arg8: memref<8x256xf32, #tpu.memory_space<vmem>>, %arg9: memref<8x256xf32, #tpu.memory_space<vmem>>) attributes {dimension_semantics = [#tpu.dimension_semantics<parallel>, #tpu.dimension_semantics<arbitrary>], iteration_bounds = array<i64: 1, 1>, scalar_prefetch = 0 : i64, scratch_operands = 1 : i64, tpu.core_type = #tpu.core_type<tc>, window_params = [{pipeline_mode = #tpu.pipeline_mode<synchronous>, transform_indices = @transform_0, window_bounds = array<i64: 8, 32>}, {transform_indices = @transform_1, window_bounds = array<i64: 32, 32>}, {transform_indices = @transform_2, window_bounds = array<i64: 1, 32>}, {transform_indices = @transform_3, window_bounds = array<i64: 1, 32>}, {transform_indices = @transform_4, window_bounds = array<i64: 32, 256>}, {transform_indices = @transform_5, window_bounds = array<i64: 1, 256>}, {transform_indices = @transform_6, window_bounds = array<i64: 8, 256>}]} {
    %c0_i32 = arith.constant 0 : i32
    %0 = arith.cmpi eq, %arg1, %c0_i32 : i32
    %1 = arith.extui %0 : i1 to i32
    %c0_i32_0 = arith.constant 0 : i32
    %2 = arith.cmpi ne, %1, %c0_i32_0 : i32
    scf.if %2 {
      %cst_23 = arith.constant 0.000000e+00 : f32
      %37 = vector.broadcast %cst_23 : f32 to vector<8x256xf32>
      %c0_24 = arith.constant 0 : index
      %c0_25 = arith.constant 0 : index
      %38 = vector.load %arg9[%c0_24, %c0_25] : memref<8x256xf32, #tpu.memory_space<vmem>>, vector<8x256xf32>
      tpu.vector_store %arg9[%c0_24, %c0_25], %37 {strides = array<i32>} : memref<8x256xf32, #tpu.memory_space<vmem>>, vector<8x256xf32>,
    } else {
    }
    %c0 = arith.constant 0 : index
    %c0_1 = arith.constant 0 : index
    %3 = vector.load %arg2[%c0, %c0_1] : memref<8x32xf32, #tpu.memory_space<vmem>>, vector<8x32xf32>
    %c0_2 = arith.constant 0 : index
    %c0_3 = arith.constant 0 : index
    %4 = vector.load %arg3[%c0_2, %c0_3] : memref<32x32xf32, #tpu.memory_space<vmem>>, vector<32x32xf32>
    %cst = arith.constant dense<0.000000e+00> : vector<8x32xf32>
    %5 = tpu.matmul %3, %4, %cst {dimension_numbers = #tpu.dot_dimension_numbers<[1], [0], [0], [1], [0, 0, 1, 1], [], []>} : vector<8x32xf32>, vector<32x32xf32>, vector<8x32xf32> -> vector<8x32xf32>
    %cst_4 = arith.constant dense<0.000000e+00> : vector<32xf32>
    %6 = vector.multi_reduction <add>, %5, %cst_4 [0] : vector<8x32xf32> to vector<32xf32>
    %7 = vector.shape_cast %6 : vector<32xf32> to vector<1x32xf32>
    %cst_5 = arith.constant 8.000000e+00 : f32
    %8 = vector.broadcast %cst_5 : f32 to vector<1x32xf32>
    %9 = arith.divf %7, %8 : vector<1x32xf32>
    %10 = vector.broadcast %9 : vector<1x32xf32> to vector<8x32xf32>
    %11 = arith.subf %5, %10 : vector<8x32xf32>
    %12 = arith.mulf %11, %11 : vector<8x32xf32>
    %cst_6 = arith.constant dense<0.000000e+00> : vector<32xf32>
    %13 = vector.multi_reduction <add>, %12, %cst_6 [0] : vector<8x32xf32> to vector<32xf32>
    %14 = vector.shape_cast %13 : vector<32xf32> to vector<1x32xf32>
    %cst_7 = arith.constant 8.000000e+00 : f32
    %15 = vector.broadcast %cst_7 : f32 to vector<1x32xf32>
    %16 = arith.divf %14, %15 : vector<1x32xf32>
    %c0_8 = arith.constant 0 : index
    %c0_9 = arith.constant 0 : index
    %17 = vector.load %arg4[%c0_8, %c0_9] : memref<1x32xf32, #tpu.memory_space<vmem>>, vector<1x32xf32>
    %cst_10 = arith.constant 9.99999974E-6 : f32
    %18 = vector.broadcast %cst_10 : f32 to vector<1x32xf32>
    %19 = arith.addf %16, %18 : vector<1x32xf32>
    %20 = math.rsqrt %19 : vector<1x32xf32>
    %21 = arith.mulf %17, %20 : vector<1x32xf32>
    %22 = vector.broadcast %21 : vector<1x32xf32> to vector<8x32xf32>
    %23 = arith.mulf %11, %22 : vector<8x32xf32>
    %c0_11 = arith.constant 0 : index
    %c0_12 = arith.constant 0 : index
    %24 = vector.load %arg5[%c0_11, %c0_12] : memref<1x32xf32, #tpu.memory_space<vmem>>, vector<1x32xf32>
    %25 = vector.broadcast %24 : vector<1x32xf32> to vector<8x32xf32>
    %26 = arith.addf %23, %25 : vector<8x32xf32>
    %cst_13 = arith.constant 0.000000e+00 : f32
    %27 = vector.broadcast %cst_13 : f32 to vector<8x32xf32>
    %28 = arith.maximumf %26, %27 : vector<8x32xf32>
    %c0_14 = arith.constant 0 : index
    %c0_15 = arith.constant 0 : index
    %29 = vector.load %arg9[%c0_14, %c0_15] : memref<8x256xf32, #tpu.memory_space<vmem>>, vector<8x256xf32>
    %c0_16 = arith.constant 0 : index
    %c0_17 = arith.constant 0 : index
    %30 = vector.load %arg6[%c0_16, %c0_17] : memref<32x256xf32, #tpu.memory_space<vmem>>, vector<32x256xf32>
    %cst_18 = arith.constant dense<0.000000e+00> : vector<8x256xf32>
    %31 = tpu.matmul %28, %30, %cst_18 {dimension_numbers = #tpu.dot_dimension_numbers<[1], [0], [0], [1], [0, 0, 1, 1], [], []>} : vector<8x32xf32>, vector<32x256xf32>, vector<8x256xf32> -> vector<8x256xf32>
    %32 = arith.addf %29, %31 : vector<8x256xf32>
    %c0_19 = arith.constant 0 : index
    %c0_20 = arith.constant 0 : index
    %33 = vector.load %arg9[%c0_19, %c0_20] : memref<8x256xf32, #tpu.memory_space<vmem>>, vector<8x256xf32>
    tpu.vector_store %arg9[%c0_19, %c0_20], %32 {strides = array<i32>} : memref<8x256xf32, #tpu.memory_space<vmem>>, vector<8x256xf32>,
    %c0_i32_21 = arith.constant 0 : i32
    %34 = arith.cmpi eq, %arg1, %c0_i32_21 : i32
    %35 = arith.extui %34 : i1 to i32
    %c0_i32_22 = arith.constant 0 : i32
    %36 = arith.cmpi ne, %35, %c0_i32_22 : i32
    scf.if %36 {
      %c0_23 = arith.constant 0 : index
      %c0_24 = arith.constant 0 : index
      %37 = vector.load %arg9[%c0_23, %c0_24] : memref<8x256xf32, #tpu.memory_space<vmem>>, vector<8x256xf32>
      %c0_25 = arith.constant 0 : index
      %c0_26 = arith.constant 0 : index
      %38 = vector.load %arg7[%c0_25, %c0_26] : memref<1x256xf32, #tpu.memory_space<vmem>>, vector<1x256xf32>
      %39 = vector.broadcast %38 : vector<1x256xf32> to vector<8x256xf32>
      %40 = arith.addf %37, %39 : vector<8x256xf32>
      %c0_27 = arith.constant 0 : index
      %c0_28 = arith.constant 0 : index
      %41 = vector.load %arg8[%c0_27, %c0_28] : memref<8x256xf32, #tpu.memory_space<vmem>>, vector<8x256xf32>
      tpu.vector_store %arg8[%c0_27, %c0_28], %40 {strides = array<i32>} : memref<8x256xf32, #tpu.memory_space<vmem>>, vector<8x256xf32>,
    } else {
    }
    return
  }
  func.func @transform_0(%arg0: i32, %arg1: i32) -> (i32, i32) {
    %c0_i32 = arith.constant 0 : i32
    %c0_i32_0 = arith.constant 0 : i32
    %c0_i32_1 = arith.constant 0 : i32
    return %c0_i32, %c0_i32_0 : i32, i32
  }
  func.func @transform_1(%arg0: i32, %arg1: i32) -> (i32, i32) {
    %c0_i32 = arith.constant 0 : i32
    %c0_i32_0 = arith.constant 0 : i32
    return %c0_i32, %arg1 : i32, i32
  }
  func.func @transform_2(%arg0: i32, %arg1: i32) -> (i32, i32) {
    %c0_i32 = arith.constant 0 : i32
    %c0_i32_0 = arith.constant 0 : i32
    return %c0_i32, %arg1 : i32, i32
  }
  func.func @transform_3(%arg0: i32, %arg1: i32) -> (i32, i32) {
    %c0_i32 = arith.constant 0 : i32
    %c0_i32_0 = arith.constant 0 : i32
    return %c0_i32, %arg1 : i32, i32
  }
  func.func @transform_4(%arg0: i32, %arg1: i32) -> (i32, i32) {
    %c0_i32 = arith.constant 0 : i32
    return %arg1, %arg0 : i32, i32
  }
  func.func @transform_5(%arg0: i32, %arg1: i32) -> (i32, i32) {
    %c0_i32 = arith.constant 0 : i32
    %c0_i32_0 = arith.constant 0 : i32
    return %c0_i32, %arg0 : i32, i32
  }
  func.func @transform_6(%arg0: i32, %arg1: i32) -> (i32, i32) {
    %c0_i32 = arith.constant 0 : i32
    %c0_i32_0 = arith.constant 0 : i32
    return %c0_i32, %arg0 : i32, i32
  }
}

</mosaic_0001>

<llo_original>
// kernel: tpu_custom_call.1
$region0: #{tpu_custom_call.1}
  #allocation0 [shape = 'u32[]', space=smem, size = 0x4, offset = 0x4, fixed_abs, tag = 'smem constant byte address 0x4 - core index']
  #allocation1 [shape = 'u32[144,128]{1,0:T(1,128)}', space=vmem, size = 0x12000, scoped, tag = 'internal scratch']
  #allocation2 [shape = 'f32[8,256]{1,0:T(8,128)}', space=vmem, size = 0x2000, scoped, tag = 'scratch operand']
  %s0 = inlined_call_operand.hbm [shape: f32[8,32], index: 0, kind: input, shape index: {}]
  %s1 = inlined_call_operand.hbm [shape: f32[32,32], index: 1, kind: input, shape index: {}]
  %s2 = inlined_call_operand.vmem [shape: f32[1,32], index: 2, kind: input, shape index: {}]
  %s3 = inlined_call_operand.vmem [shape: f32[1,32], index: 3, kind: input, shape index: {}]
  %s4 = inlined_call_operand.hbm [shape: f32[32,256], index: 4, kind: input, shape index: {}]
  %s5 = inlined_call_operand.vmem [shape: f32[1,256], index: 5, kind: input, shape index: {}]
  %s6 = inlined_call_operand.hbm [shape: f32[8,256], index: 6, kind: output, shape index: {}]
  %s7 = sld [smem:[#allocation0]]
  $region54: #{tpu_custom_call.1} parent=0
    _
  %s9 = ssub.s32 1, %s7
  %s10 = scalar_select 0, %s9, %s7
  $region1: #{tpu_custom_call.1} parent=0
    #allocation3 [shape = 'u8[4096]{0}', space=vmem, size = 0x1000, scoped, tag = 'input window, operand 0, single buffered']
    #allocation4 [shape = 's32[1]{0}', space=sflag, size = 0x4, scoped, tag = 'scoped memory for tpu_custom_call.1']
    #allocation5 [shape = 's32[1]{0}', space=sflag, size = 0x4, scoped, tag = 'scoped memory for tpu_custom_call.1']
    #allocation6 [shape = 'u8[16384]{0}', space=vmem, size = 0x4000, scoped, tag = 'input window, operand 1, single buffered']
    #allocation7 [shape = 's32[1]{0}', space=sflag, size = 0x4, scoped, tag = 'scoped memory for tpu_custom_call.1']
    #allocation8 [shape = 'u8[32768]{0}', space=vmem, size = 0x8000, scoped, tag = 'input window, operand 4, single buffered']
    #allocation9 [shape = 'u8[8192]{0}', space=vmem, size = 0x2000, scoped, tag = 'output window, operand 0, single buffered']
    %11 = vsyncpa [#allocation4], 0
    %12 = vsyncpa [#allocation7], 0
    %13 = vsyncpa [#allocation5], 0
    // Predicated region
    $region2: #{tpu_custom_call.1} parent=1 // pred_check
      _
    $region3: #{tpu_custom_call.1} parent=1 // pred_check_branch
      %15 = sbr.rel (0) target = $region5
    $region4: #{tpu_custom_call.1} parent=1 // pred_region
      %s17 = ssub.s32 128, 128
      %18 = vsyncadd [#allocation4], %s17
      %s20 = sshll.u32 [#allocation3], 4
      %s21 = int_to_ptr.vmem [resolvable:$true] %s20
      %23 = dma.hbm_to_vmem [thread:$0]  %s0, 128, %s21, [#allocation4]
    $region5: #{tpu_custom_call.1} parent=1 // pred_fallthru
      _
    // Predicated region
    $region6: #{tpu_custom_call.1} parent=1 // pred_check
      _
    $region7: #{tpu_custom_call.1} parent=1 // pred_check_branch
      %25 = sbr.rel (0) target = $region9
    $region8: #{tpu_custom_call.1} parent=1 // pred_region
      %s27 = ssub.s32 512, 512
      %28 = vsyncadd [#allocation7], %s27
      %s29 = sshll.u32 [#allocation6], 4
      %s30 = int_to_ptr.vmem [resolvable:$true] %s29
      %35 = dma.hbm_to_vmem [thread:$0]  %s1, 512, %s30, [#allocation7], 128, 128, 8
    $region9: #{tpu_custom_call.1} parent=1 // pred_fallthru
      _
    // Predicated region
    $region10: #{tpu_custom_call.1} parent=1 // pred_check
      _
    $region11: #{tpu_custom_call.1} parent=1 // pred_check_branch
      %37 = sbr.rel (0) target = $region13
    $region12: #{tpu_custom_call.1} parent=1 // pred_region
      _
    $region13: #{tpu_custom_call.1} parent=1 // pred_fallthru
      _
    // Predicated region
    $region14: #{tpu_custom_call.1} parent=1 // pred_check
      _
    $region15: #{tpu_custom_call.1} parent=1 // pred_check_branch
      %39 = sbr.rel (0) target = $region17
    $region16: #{tpu_custom_call.1} parent=1 // pred_region
      _
    $region17: #{tpu_custom_call.1} parent=1 // pred_fallthru
      _
    // Predicated region
    $region18: #{tpu_custom_call.1} parent=1 // pred_check
      _
    $region19: #{tpu_custom_call.1} parent=1 // pred_check_branch
      %41 = sbr.rel (0) target = $region21
    $region20: #{tpu_custom_call.1} parent=1 // pred_region
      %s43 = ssub.s32 1024, 1024
      %44 = vsyncadd [#allocation7], %s43
      %s45 = sshll.u32 [#allocation8], 4
      %s46 = int_to_ptr.vmem [resolvable:$true] %s45
      %51 = dma.hbm_to_vmem [thread:$0]  %s4, 1024, %s46, [#allocation7], 256, 256, 16
    $region21: #{tpu_custom_call.1} parent=1 // pred_fallthru
      _
    // Predicated region
    $region22: #{tpu_custom_call.1} parent=1 // pred_check
      _
    $region23: #{tpu_custom_call.1} parent=1 // pred_check_branch
      %53 = sbr.rel (0) target = $region25
    $region24: #{tpu_custom_call.1} parent=1 // pred_region
      _
    $region25: #{tpu_custom_call.1} parent=1 // pred_fallthru
      _
    // Predicated region
    $region26: #{tpu_custom_call.1} parent=1 // pred_check
      _
    $region27: #{tpu_custom_call.1} parent=1 // pred_check_branch
      %55 = sbr.rel (0) target = $region29
    $region28: #{tpu_custom_call.1} parent=1 // pred_region
      %56 = dma.done [#allocation4], 128
    $region29: #{tpu_custom_call.1} parent=1 // pred_fallthru
      _
    // Predicated region
    $region30: #{tpu_custom_call.1} parent=1 // pred_check
      _
    $region31: #{tpu_custom_call.1} parent=1 // pred_check_branch
      %58 = sbr.rel (0) target = $region33
    $region32: #{tpu_custom_call.1} parent=1 // pred_region
      %59 = dma.done [#allocation7], 512
    $region33: #{tpu_custom_call.1} parent=1 // pred_fallthru
      _
    // Predicated region
    $region34: #{tpu_custom_call.1} parent=1 // pred_check
      _
    $region35: #{tpu_custom_call.1} parent=1 // pred_check_branch
      %61 = sbr.rel (0) target = $region37
    $region36: #{tpu_custom_call.1} parent=1 // pred_region
      %62 = dma.done [#allocation7], 1024
    $region37: #{tpu_custom_call.1} parent=1 // pred_fallthru
      _
    %p63 = scmp.eq.s32.totalorder 0, 0
    // Predicated region
    $region38: #{tpu_custom_call.1} parent=1 // pred_check
      %p64 = pneg %p63
    $region39: #{tpu_custom_call.1} parent=1 // pred_check_branch
      %66 = sbr.rel (%p64) target = $region41
    $region40: #{tpu_custom_call.1} parent=1 // pred_region
      %67 = vst [vmem:[#allocation2] sm:$0xff] 0.0
      %68 = vst [vmem:[#allocation2 + $0x8] sm:$0xff] 0.0
    $region41: #{tpu_custom_call.1} parent=1 // pred_fallthru
      _
    %v69 = vld [vmem:[#allocation3] sm:$0xff]
    %v70 = vld [vmem:[#allocation6] sm:$0xff]
    %v71 = vld [vmem:[#allocation6 + $0x8] sm:$0xff]
    %v72 = vld [vmem:[#allocation6 + $0x10] sm:$0xff]
    %v73 = vld [vmem:[#allocation6 + $0x18] sm:$0xff]
    %vm74 = vcmask 261120
    %v76 = vsel %vm74, %v69, 0
    %78 = vmatprep.subr.mxu0 0.0
    %79 = vmatpush1.msra.mxu0 %v70
    %80 = vmatprep.subr.mxu0 0.0
    %81 = vmatpush1.msra.mxu0 %v71
    %82 = vmatprep.subr.mxu0 0.0
    %83 = vmatpush1.msra.mxu0 %v72
    %84 = vmatprep.subr.mxu0 0.0
    %85 = vmatpush1.msra.mxu0 %v73
    %86 = vmatprep.subr.mxu0 0.0
    %87 = vmatpush1.msra.mxu0 0.0
    %88 = vmatprep.subr.mxu0 0.0
    %89 = vmatpush1.msra.mxu0 0.0
    %90 = vmatprep.subr.mxu0 0.0
    %91 = vmatpush1.msra.mxu0 0.0
    %92 = vmatprep.subr.mxu0 0.0
    %93 = vmatpush1.msra.mxu0 0.0
    %94 = vmatprep.subr.mxu0 0.0
    %95 = vmatpush1.msra.mxu0 0.0
    %96 = vmatprep.subr.mxu0 0.0
    %97 = vmatpush1.msra.mxu0 0.0
    %98 = vmatprep.subr.mxu0 0.0
    %99 = vmatpush1.msra.mxu0 0.0
    %100 = vmatprep.subr.mxu0 0.0
    %101 = vmatpush1.msra.mxu0 0.0
    %102 = vmatprep.subr.mxu0 0.0
    %103 = vmatpush1.msra.mxu0 0.0
    %104 = vmatprep.subr.mxu0 0.0
    %105 = vmatpush1.msra.mxu0 0.0
    %106 = vmatprep.subr.mxu0 0.0
    %107 = vmatpush1.msra.mxu0 0.0
    %108 = vmatprep.subr.mxu0 0.0
    %109 = vmatpush1.msra.mxu0 0.0
    %110 = vmatprep.subr.mxu0 0.0
    %111 = vmatpush1.msra.mxu0 0.0
    %112 = vmatprep.subr.mxu0 0.0
    %113 = vmatpush1.msra.mxu0 0.0
    %114 = vmatprep.subr.mxu0 0.0
    %115 = vmatpush1.msra.mxu0 0.0
    %116 = vmatprep.subr.mxu0 0.0
    %117 = vmatpush1.msra.mxu0 0.0
    %118 = vmatprep.subr.mxu0 0.0
    %119 = vmatpush1.msra.mxu0 0.0
    %120 = vmatprep.subr.mxu0 0.0
    %121 = vmatpush1.msra.mxu0 0.0
    %122 = vmatprep.subr.mxu0 0.0
    %123 = vmatpush1.msra.mxu0 0.0
    %124 = vmatprep.subr.mxu0 0.0
    %125 = vmatpush1.msra.mxu0 0.0
    %126 = vmatprep.subr.mxu0 0.0
    %127 = vmatpush1.msra.mxu0 0.0
    %128 = vmatprep.subr.mxu0 0.0
    %129 = vmatpush1.msra.mxu0 0.0
    %130 = vmatprep.subr.mxu0 0.0
    %131 = vmatpush1.msra.mxu0 0.0
    %132 = vmatprep.subr.mxu0 0.0
    %133 = vmatpush1.msra.mxu0 0.0
    %134 = vmatprep.subr.mxu0 0.0
    %135 = vmatpush1.msra.mxu0 0.0
    %136 = vmatprep.subr.mxu0 0.0
    %137 = vmatpush1.msra.mxu0 0.0
    %138 = vmatprep.subr.mxu0 0.0
    %139 = vmatpush1.msra.mxu0 0.0
    %140 = vmatprep.subr.mxu0 0.0
    %141 = vmatpush1.msra.mxu0 0.0
    %142 = vmatprep.mubr.f32.mxu0 0.0
    %143 = vmatmul.mubr.f32.gmra.mrb[0].mxu0 %v76
    %v144 = vpop.f32.mrb[0].mxu0
    %v145 = vadd.f32 0.0, %v144
    %v146 = vpop.f32.mrb[0].mxu0
    %147 = vdwg.mxu0
    %v148 = vsel %vm74, %v145, 0.0
    %v149 = vrot.slane %v148, 4
    %v150 = vadd.f32 %v148, %v149
    %v151 = vrot.slane %v150, 2
    %v152 = vadd.f32 %v150, %v151
    %v153 = vrot.slane %v152, 1
    %v154 = vadd.f32 %v152, %v153
    %v155 = vrcp.pop 8.0
    %v156 = vmul.f32 %v154, %v155
    %v157 = vsub.f32 %v145, %v156
    %v158 = vmul.f32 %v157, %v157
    %v159 = vsel %vm74, %v158, 0.0
    %v160 = vrot.slane %v159, 4
    %v161 = vadd.f32 %v159, %v160
    %v162 = vrot.slane %v161, 2
    %v163 = vadd.f32 %v161, %v162
    %v164 = vrot.slane %v163, 1
    %v165 = vadd.f32 %v163, %v164
    %v166 = vmul.f32 %v165, %v155
    %v167 = vld [vmem:[%s2] sm:$0x1]
    %v168 = vadd.f32 %v166, 1e-05
    %v169 = vrsqrt.pop %v168
    %v170 = vmul.f32 %v167, %v169
    %v172 = vlaneseq
    %v173 = vshrl.u32 %v172, 7
    %v174 = vsub.s32 0, %v173
    %v175 = vrot.slane %v170, %v174
    %v177 = vmul.f32 %v157, %v175
    %v178 = vld [vmem:[%s3] sm:$0x1]
    %v180 = vlaneseq
    %v181 = vshrl.u32 %v180, 7
    %v182 = vsub.s32 0, %v181
    %v183 = vrot.slane %v178, %v182
    %v185 = vadd.f32 %v177, %v183
    %v186 = vmax.f32 %v185, 0.0
    %v187 = vld [vmem:[#allocation2] sm:$0xff]
    %v188 = vld [vmem:[#allocation2 + $0x8] sm:$0xff]
    %v189 = vld [vmem:[#allocation8] sm:$0xff]
    %v190 = vld [vmem:[#allocation8 + $0x8] sm:$0xff]
    %v191 = vld [vmem:[#allocation8 + $0x10] sm:$0xff]
    %v192 = vld [vmem:[#allocation8 + $0x18] sm:$0xff]
    %v193 = vld [vmem:[#allocation8 + $0x20] sm:$0xff]
    %v194 = vld [vmem:[#allocation8 + $0x28] sm:$0xff]
    %v195 = vld [vmem:[#allocation8 + $0x30] sm:$0xff]
    %v196 = vld [vmem:[#allocation8 + $0x38] sm:$0xff]
    %v198 = vsel %vm74, %v186, 0
    %200 = vmatprep.subr.mxu0 %v190
    %201 = vmatpush1.msra.mxu0 %v189
    %202 = vmatprep.subr.mxu0 %v192
    %203 = vmatpush1.msra.mxu0 %v191
    %204 = vmatprep.subr.mxu0 %v194
    %205 = vmatpush1.msra.mxu0 %v193
    %206 = vmatprep.subr.mxu0 %v196
    %207 = vmatpush1.msra.mxu0 %v195
    %208 = vmatprep.subr.mxu0 0.0
    %209 = vmatpush1.msra.mxu0 0.0
    %210 = vmatprep.subr.mxu0 0.0
    %211 = vmatpush1.msra.mxu0 0.0
    %212 = vmatprep.subr.mxu0 0.0
    %213 = vmatpush1.msra.mxu0 0.0
    %214 = vmatprep.subr.mxu0 0.0
    %215 = vmatpush1.msra.mxu0 0.0
    %216 = vmatprep.subr.mxu0 0.0
    %217 = vmatpush1.msra.mxu0 0.0
    %218 = vmatprep.subr.mxu0 0.0
    %219 = vmatpush1.msra.mxu0 0.0
    %220 = vmatprep.subr.mxu0 0.0
    %221 = vmatpush1.msra.mxu0 0.0
    %222 = vmatprep.subr.mxu0 0.0
    %223 = vmatpush1.msra.mxu0 0.0
    %224 = vmatprep.subr.mxu0 0.0
    %225 = vmatpush1.msra.mxu0 0.0
    %226 = vmatprep.subr.mxu0 0.0
    %227 = vmatpush1.msra.mxu0 0.0
    %228 = vmatprep.subr.mxu0 0.0
    %229 = vmatpush1.msra.mxu0 0.0
    %230 = vmatprep.subr.mxu0 0.0
    %231 = vmatpush1.msra.mxu0 0.0
    %232 = vmatprep.subr.mxu0 0.0
    %233 = vmatpush1.msra.mxu0 0.0
    %234 = vmatprep.subr.mxu0 0.0
    %235 = vmatpush1.msra.mxu0 0.0
    %236 = vmatprep.subr.mxu0 0.0
    %237 = vmatpush1.msra.mxu0 0.0
    %238 = vmatprep.subr.mxu0 0.0
    %239 = vmatpush1.msra.mxu0 0.0
    %240 = vmatprep.subr.mxu0 0.0
    %241 = vmatpush1.msra.mxu0 0.0
    %242 = vmatprep.subr.mxu0 0.0
    %243 = vmatpush1.msra.mxu0 0.0
    %244 = vmatprep.subr.mxu0 0.0
    %245 = vmatpush1.msra.mxu0 0.0
    %246 = vmatprep.subr.mxu0 0.0
    %247 = vmatpush1.msra.mxu0 0.0
    %248 = vmatprep.subr.mxu0 0.0
    %249 = vmatpush1.msra.mxu0 0.0
    %250 = vmatprep.subr.mxu0 0.0
    %251 = vmatpush1.msra.mxu0 0.0
    %252 = vmatprep.subr.mxu0 0.0
    %253 = vmatpush1.msra.mxu0 0.0
    %254 = vmatprep.subr.mxu0 0.0
    %255 = vmatpush1.msra.mxu0 0.0
    %256 = vmatprep.subr.mxu0 0.0
    %257 = vmatpush1.msra.mxu0 0.0
    %258 = vmatprep.subr.mxu0 0.0
    %259 = vmatpush1.msra.mxu0 0.0
    %260 = vmatprep.subr.mxu0 0.0
    %261 = vmatpush1.msra.mxu0 0.0
    %262 = vmatprep.subr.mxu0 0.0
    %263 = vmatpush1.msra.mxu0 0.0
    %264 = vmatprep.mubr.f32.mxu0 0.0
    %265 = vmatmul.mubr.f32.gmra.mrb[0].mxu0 %v198
    %v266 = vpop.f32.mrb[0].mxu0
    %v267 = vadd.f32 0.0, %v266
    %v268 = vpop.f32.mrb[0].mxu0
    %v269 = vadd.f32 0.0, %v268
    %270 = vdwg.mxu0
    %v271 = vadd.f32 %v187, %v267
    %v272 = vadd.f32 %v188, %v269
    %273 = vst [vmem:[#allocation2] sm:$0xff] %v271
    %274 = vst [vmem:[#allocation2 + $0x8] sm:$0xff] %v272
    // Predicated region
    $region42: #{tpu_custom_call.1} parent=1 // pred_check
      %p275 = pneg %p63
    $region43: #{tpu_custom_call.1} parent=1 // pred_check_branch
      %277 = sbr.rel (%p275) target = $region45
    $region44: #{tpu_custom_call.1} parent=1 // pred_region
      %v278 = vld [vmem:[#allocation2] sm:$0xff]
      %v279 = vld [vmem:[#allocation2 + $0x8] sm:$0xff]
      %v280 = vld [vmem:[%s5] sm:$0x3]
      %v282 = vlaneseq
      %v283 = vshrl.u32 %v282, 7
      %v284 = vsub.s32 0, %v283
      %v285 = vrot.slane %v280, %v284
      %v286 = vlaneseq
      %v287 = vshrl.u32 %v286, 7
      %v288 = vsub.s32 1, %v287
      %v289 = vrot.slane %v280, %v288
      %v292 = vadd.f32 %v278, %v285
      %v293 = vadd.f32 %v279, %v289
      %294 = vst [vmem:[#allocation9] sm:$0xff] %v292
      %295 = vst [vmem:[#allocation9 + $0x8] sm:$0xff] %v293
    $region45: #{tpu_custom_call.1} parent=1 // pred_fallthru
      _
    // Predicated region
    $region46: #{tpu_custom_call.1} parent=1 // pred_check
      _
    $region47: #{tpu_custom_call.1} parent=1 // pred_check_branch
      %297 = sbr.rel (0) target = $region49
    $region48: #{tpu_custom_call.1} parent=1 // pred_region
      %s299 = ssub.s32 256, 256
      %300 = vsyncadd [#allocation5], %s299
      %s302 = sshll.u32 [#allocation9], 4
      %s303 = int_to_ptr.vmem [resolvable:$true] %s302
      %305 = dma.vmem_to_hbm [thread:$0]  %s303, 256, %s6, [#allocation5]
    $region49: #{tpu_custom_call.1} parent=1 // pred_fallthru
      _
    // Predicated region
    $region50: #{tpu_custom_call.1} parent=1 // pred_check
      _
    $region51: #{tpu_custom_call.1} parent=1 // pred_check_branch
      %307 = sbr.rel (0) target = $region53
    $region52: #{tpu_custom_call.1} parent=1 // pred_region
      %308 = dma.done [#allocation5], 256
    $region53: #{tpu_custom_call.1} parent=1 // pred_fallthru
      _
    %309 = vsyncpa [#allocation4], 1
    %310 = vsyncpa [#allocation7], 1
    %311 = vsyncpa [#allocation5], 1

</llo_original>
